<compile_context>
chip_gen: v6e
topology: v6e:2x2x1
jax: 0.10.0
libtpu: 0.0.40
codegen_flags: <defaults>
</compile_context>

<pallas_src>
import functools

import jax
import jax.numpy as jnp
from jax import lax
from jax.experimental import pallas as pl
from jax.experimental.pallas import tpu as pltpu


def _conv3x3_kernel(x_ref, w_ref, b_ref, o_ref, *, W):
    # x_ref: (Cin, H*W)        flattened NCHW image, one batch element
    # w_ref: (Cout_t, 9*Cin)   column t*Cin + ci = weight[co, ci, dy, dx], t = dy*3+dx
    # b_ref: (Cout_t, 1)
    # o_ref: (Cout_t, H*W)     lane-dense flattened output
    Cin, HW = x_ref.shape
    Cout_t = o_ref.shape[0]
    H = HW // W

    # Load + cast ONCE (no per-tap casts). Keep f32 operands for exactness vs
    # the f32 reference; flip to bf16 here if accuracy budget allows.
    x = x_ref[...].astype(jnp.float32)                      # (Cin, HW)
    w = w_ref[...].astype(jnp.float32)                      # (Cout_t, 9*Cin)

    # Flat zero halo of W+1 on both sides covers every (dy, dx) flat shift,
    # i.e. the ZeroPad2d(1) rows/edges, without any padded HBM array.
    zpad = jnp.zeros((Cin, W + 1), dtype=jnp.float32)
    xp = jnp.concatenate([zpad, x, zpad], axis=1)           # (Cin, HW + 2W + 2)

    # Column index (p mod W) for every flat output position, built with
    # iota + lane concatenation only (hoisted out of the tap loop).
    row_col = lax.broadcasted_iota(jnp.int32, (Cin, W), 1)  # 0..W-1
    col = jnp.concatenate([row_col] * H, axis=1)            # (Cin, HW)
    not_left = col != 0                                     # dx == 0 reads col-1
    not_right = col != (W - 1)                              # dx == 2 reads col+1

    # Bias folded into the accumulator init (single hoisted broadcast).
    acc = jnp.broadcast_to(b_ref[...].astype(jnp.float32), (Cout_t, HW))

    # 9 taps: (Cout_t, Cin) x (Cin, HW) MXU matmuls with f32 accumulation.
    for dy in range(3):
        for dx in range(3):
            t = dy * 3 + dx
            start = (W + 1) + (dy - 1) * W + (dx - 1)
            rhs = xp[:, start:start + HW]                   # flat-shifted view
            if dx == 0:
                rhs = jnp.where(not_left, rhs, 0.0)         # zero the wrapped left edge
            elif dx == 2:
                rhs = jnp.where(not_right, rhs, 0.0)        # zero the wrapped right edge
            w_tap = w[:, t * Cin:(t + 1) * Cin]             # (Cout_t, Cin)
            acc = acc + jnp.dot(w_tap, rhs, preferred_element_type=jnp.float32)

    o_ref[...] = acc.astype(o_ref.dtype)                    # one dense, lane-wide store


def conv3x3_pallas(x_nchw, weight, bias):
    """Equivalent of Conv3x3.forward: ZeroPad2d(1) followed by Conv2d(k=3).

    x_nchw : (N, Cin, H, W)      float32
    weight : (Cout, Cin, 3, 3)   float32  (PyTorch conv weight layout)
    bias   : (Cout,)             float32
    returns: (N, Cout, H, W)     float32
    """
    N, Cin, H, W = x_nchw.shape
    Cout = weight.shape[0]
    HW = H * W

    # Metadata-only reshape: NCHW is already (N, Cin, H*W)-contiguous.
    x_flat = x_nchw.reshape(N, Cin, HW)
    # Pack all 9 taps into one (Cout, 9*Cin) tile; column index = t*Cin + ci.
    w_packed = jnp.transpose(weight, (0, 2, 3, 1)).reshape(Cout, 9 * Cin)
    b_col = bias.reshape(Cout, 1)

    # Output-channel tiling: gives a second "parallel" grid axis (v7x megacore)
    # and bounds the weight/output blocks for large Cout.
    tco = Cout if Cout < 128 else 128
    assert Cout % tco == 0
    n_co = Cout // tco

    kernel = functools.partial(_conv3x3_kernel, W=W)
    out_flat = pl.pallas_call(
        kernel,
        out_shape=jax.ShapeDtypeStruct((N, Cout, HW), x_nchw.dtype),
        grid_spec=pltpu.PrefetchScalarGridSpec(
            num_scalar_prefetch=0,
            grid=(N, n_co),
            in_specs=[
                pl.BlockSpec((None, Cin, HW), lambda n, c: (n, 0, 0)),
                pl.BlockSpec((tco, 9 * Cin), lambda n, c: (c, 0)),
                pl.BlockSpec((tco, 1), lambda n, c: (c, 0)),
            ],
            out_specs=pl.BlockSpec((None, tco, HW), lambda n, c: (n, c, 0)),
        ),
        compiler_params=pltpu.CompilerParams(
            dimension_semantics=("parallel", "parallel"),
            vmem_limit_bytes=32 * 1024 * 1024,
        ),
    )(x_flat, w_packed, b_col)

    # Free reshape back to NCHW: no output transpose, no extra HBM pass.
    return out_flat.reshape(N, Cout, H, W)


def _init_conv_params(key, in_channels, out_channels, ksize=3):
    # Deterministic init mimicking nn.Conv2d defaults (kaiming-uniform-ish bounds).
    kw, kb = jax.random.split(key)
    fan_in = in_channels * ksize * ksize
    bound = 1.0 / (fan_in ** 0.5)
    weight = jax.random.uniform(
        kw, (out_channels, in_channels, ksize, ksize),
        minval=-bound, maxval=bound, dtype=jnp.float32)
    bias = jax.random.uniform(
        kb, (out_channels,), minval=-bound, maxval=bound, dtype=jnp.float32)
    return weight, bias


if __name__ == "__main__":
    key = jax.random.PRNGKey(0)
    k_x, k_p = jax.random.split(key)

    N, Cin, H, W = 2, 4, 16, 16
    Cout = 8

    x = jax.random.normal(k_x, (N, Cin, H, W), dtype=jnp.float32)
    weight, bias = _init_conv_params(k_p, Cin, Cout)

    out = conv3x3_pallas(x, weight, bias)
    out = jax.block_until_ready(out)

    # Sanity check against XLA's conv (same semantics as the PyTorch module).
    ref = lax.conv_general_dilated(
        x, weight, window_strides=(1, 1), padding=((1, 1), (1, 1)),
        dimension_numbers=("NCHW", "OIHW", "NCHW"),
    ) + bias[None, :, None, None]
    assert out.shape == (N, Cout, H, W)
    assert jnp.allclose(out, ref, atol=1e-4, rtol=1e-4)

    print("KERNEL_OK")
</pallas_src>

<mosaic_0001>
module attributes {stable_mosaic.version = 11 : i64} {
  func.func @_conv3x3_kernel(%arg0: i32, %arg1: i32, %arg2: memref<1x4x256xf32, #tpu.memory_space<vmem>>, %arg3: memref<8x36xf32, #tpu.memory_space<vmem>>, %arg4: memref<8x1xf32, #tpu.memory_space<vmem>>, %arg5: memref<1x8x256xf32, #tpu.memory_space<vmem>>) attributes {dimension_semantics = [#tpu.dimension_semantics<parallel>, #tpu.dimension_semantics<parallel>], iteration_bounds = array<i64: 2, 1>, scalar_prefetch = 0 : i64, scratch_operands = 0 : i64, tpu.core_type = #tpu.core_type<tc>, window_params = [{transform_indices = @transform_0, window_bounds = array<i64: 1, 4, 256>}, {transform_indices = @transform_1, window_bounds = array<i64: 8, 36>}, {transform_indices = @transform_2, window_bounds = array<i64: 8, 1>}, {transform_indices = @transform_3, window_bounds = array<i64: 1, 8, 256>}]} {
    %c0 = arith.constant 0 : index
    %c0_0 = arith.constant 0 : index
    %c0_1 = arith.constant 0 : index
    %0 = vector.load %arg2[%c0, %c0_0, %c0_1] : memref<1x4x256xf32, #tpu.memory_space<vmem>>, vector<1x4x256xf32>
    %1 = vector.shape_cast %0 : vector<1x4x256xf32> to vector<4x256xf32>
    %c0_2 = arith.constant 0 : index
    %c0_3 = arith.constant 0 : index
    %2 = vector.load %arg3[%c0_2, %c0_3] : memref<8x36xf32, #tpu.memory_space<vmem>>, vector<8x36xf32>
    %cst = arith.constant 0.000000e+00 : f32
    %3 = vector.broadcast %cst : f32 to vector<4x17xf32>
    %4 = tpu.concatenate %3, %1, %3 in 1 : vector<4x17xf32>, vector<4x256xf32>, vector<4x17xf32> -> vector<4x290xf32>
    %5 = tpu.iota {dimensions = array<i32: 1>} : vector<4x16xi32>
    %6 = tpu.concatenate %5, %5, %5, %5, %5, %5, %5, %5, %5, %5, %5, %5, %5, %5, %5, %5 in 1 : vector<4x16xi32>, vector<4x16xi32>, vector<4x16xi32>, vector<4x16xi32>, vector<4x16xi32>, vector<4x16xi32>, vector<4x16xi32>, vector<4x16xi32>, vector<4x16xi32>, vector<4x16xi32>, vector<4x16xi32>, vector<4x16xi32>, vector<4x16xi32>, vector<4x16xi32>, vector<4x16xi32>, vector<4x16xi32> -> vector<4x256xi32>
    %c0_i32 = arith.constant 0 : i32
    %7 = vector.broadcast %c0_i32 : i32 to vector<4x256xi32>
    %8 = arith.cmpi ne, %6, %7 : vector<4x256xi32>
    %c15_i32 = arith.constant 15 : i32
    %9 = vector.broadcast %c15_i32 : i32 to vector<4x256xi32>
    %10 = arith.cmpi ne, %6, %9 : vector<4x256xi32>
    %c0_4 = arith.constant 0 : index
    %c0_5 = arith.constant 0 : index
    %11 = vector.load %arg4[%c0_4, %c0_5] : memref<8x1xf32, #tpu.memory_space<vmem>>, vector<8x1xf32>
    %12 = vector.shape_cast %11 : vector<8x1xf32> to vector<8x1xf32>
    %13 = vector.broadcast %12 : vector<8x1xf32> to vector<8x256xf32>
    %14 = vector.extract_strided_slice %4 {offsets = [0, 0], sizes = [4, 256], strides = [1, 1]} : vector<4x290xf32> to vector<4x256xf32>
    %cst_6 = arith.constant 0.000000e+00 : f32
    %15 = vector.broadcast %cst_6 : f32 to vector<4x256xf32>
    %16 = arith.select %8, %14, %15 : vector<4x256xi1>, vector<4x256xf32>
    %17 = vector.extract_strided_slice %2 {offsets = [0, 0], sizes = [8, 4], strides = [1, 1]} : vector<8x36xf32> to vector<8x4xf32>
    %cst_7 = arith.constant dense<0.000000e+00> : vector<8x256xf32>
    %18 = tpu.matmul %17, %16, %cst_7 {dimension_numbers = #tpu.dot_dimension_numbers<[1], [0], [0], [1], [0, 0, 1, 1], [], []>} : vector<8x4xf32>, vector<4x256xf32>, vector<8x256xf32> -> vector<8x256xf32>
    %19 = arith.addf %13, %18 : vector<8x256xf32>
    %20 = vector.extract_strided_slice %4 {offsets = [0, 1], sizes = [4, 256], strides = [1, 1]} : vector<4x290xf32> to vector<4x256xf32>
    %21 = vector.extract_strided_slice %2 {offsets = [0, 4], sizes = [8, 4], strides = [1, 1]} : vector<8x36xf32> to vector<8x4xf32>
    %cst_8 = arith.constant dense<0.000000e+00> : vector<8x256xf32>
    %22 = tpu.matmul %21, %20, %cst_8 {dimension_numbers = #tpu.dot_dimension_numbers<[1], [0], [0], [1], [0, 0, 1, 1], [], []>} : vector<8x4xf32>, vector<4x256xf32>, vector<8x256xf32> -> vector<8x256xf32>
    %23 = arith.addf %19, %22 : vector<8x256xf32>
    %24 = vector.extract_strided_slice %4 {offsets = [0, 2], sizes = [4, 256], strides = [1, 1]} : vector<4x290xf32> to vector<4x256xf32>
    %cst_9 = arith.constant 0.000000e+00 : f32
    %25 = vector.broadcast %cst_9 : f32 to vector<4x256xf32>
    %26 = arith.select %10, %24, %25 : vector<4x256xi1>, vector<4x256xf32>
    %27 = vector.extract_strided_slice %2 {offsets = [0, 8], sizes = [8, 4], strides = [1, 1]} : vector<8x36xf32> to vector<8x4xf32>
    %cst_10 = arith.constant dense<0.000000e+00> : vector<8x256xf32>
    %28 = tpu.matmul %27, %26, %cst_10 {dimension_numbers = #tpu.dot_dimension_numbers<[1], [0], [0], [1], [0, 0, 1, 1], [], []>} : vector<8x4xf32>, vector<4x256xf32>, vector<8x256xf32> -> vector<8x256xf32>
    %29 = arith.addf %23, %28 : vector<8x256xf32>
    %30 = vector.extract_strided_slice %4 {offsets = [0, 16], sizes = [4, 256], strides = [1, 1]} : vector<4x290xf32> to vector<4x256xf32>
    %cst_11 = arith.constant 0.000000e+00 : f32
    %31 = vector.broadcast %cst_11 : f32 to vector<4x256xf32>
    %32 = arith.select %8, %30, %31 : vector<4x256xi1>, vector<4x256xf32>
    %33 = vector.extract_strided_slice %2 {offsets = [0, 12], sizes = [8, 4], strides = [1, 1]} : vector<8x36xf32> to vector<8x4xf32>
    %cst_12 = arith.constant dense<0.000000e+00> : vector<8x256xf32>
    %34 = tpu.matmul %33, %32, %cst_12 {dimension_numbers = #tpu.dot_dimension_numbers<[1], [0], [0], [1], [0, 0, 1, 1], [], []>} : vector<8x4xf32>, vector<4x256xf32>, vector<8x256xf32> -> vector<8x256xf32>
    %35 = arith.addf %29, %34 : vector<8x256xf32>
    %36 = vector.extract_strided_slice %4 {offsets = [0, 17], sizes = [4, 256], strides = [1, 1]} : vector<4x290xf32> to vector<4x256xf32>
    %37 = vector.extract_strided_slice %2 {offsets = [0, 16], sizes = [8, 4], strides = [1, 1]} : vector<8x36xf32> to vector<8x4xf32>
    %cst_13 = arith.constant dense<0.000000e+00> : vector<8x256xf32>
    %38 = tpu.matmul %37, %36, %cst_13 {dimension_numbers = #tpu.dot_dimension_numbers<[1], [0], [0], [1], [0, 0, 1, 1], [], []>} : vector<8x4xf32>, vector<4x256xf32>, vector<8x256xf32> -> vector<8x256xf32>
    %39 = arith.addf %35, %38 : vector<8x256xf32>
    %40 = vector.extract_strided_slice %4 {offsets = [0, 18], sizes = [4, 256], strides = [1, 1]} : vector<4x290xf32> to vector<4x256xf32>
    %cst_14 = arith.constant 0.000000e+00 : f32
    %41 = vector.broadcast %cst_14 : f32 to vector<4x256xf32>
    %42 = arith.select %10, %40, %41 : vector<4x256xi1>, vector<4x256xf32>
    %43 = vector.extract_strided_slice %2 {offsets = [0, 20], sizes = [8, 4], strides = [1, 1]} : vector<8x36xf32> to vector<8x4xf32>
    %cst_15 = arith.constant dense<0.000000e+00> : vector<8x256xf32>
    %44 = tpu.matmul %43, %42, %cst_15 {dimension_numbers = #tpu.dot_dimension_numbers<[1], [0], [0], [1], [0, 0, 1, 1], [], []>} : vector<8x4xf32>, vector<4x256xf32>, vector<8x256xf32> -> vector<8x256xf32>
    %45 = arith.addf %39, %44 : vector<8x256xf32>
    %46 = vector.extract_strided_slice %4 {offsets = [0, 32], sizes = [4, 256], strides = [1, 1]} : vector<4x290xf32> to vector<4x256xf32>
    %cst_16 = arith.constant 0.000000e+00 : f32
    %47 = vector.broadcast %cst_16 : f32 to vector<4x256xf32>
    %48 = arith.select %8, %46, %47 : vector<4x256xi1>, vector<4x256xf32>
    %49 = vector.extract_strided_slice %2 {offsets = [0, 24], sizes = [8, 4], strides = [1, 1]} : vector<8x36xf32> to vector<8x4xf32>
    %cst_17 = arith.constant dense<0.000000e+00> : vector<8x256xf32>
    %50 = tpu.matmul %49, %48, %cst_17 {dimension_numbers = #tpu.dot_dimension_numbers<[1], [0], [0], [1], [0, 0, 1, 1], [], []>} : vector<8x4xf32>, vector<4x256xf32>, vector<8x256xf32> -> vector<8x256xf32>
    %51 = arith.addf %45, %50 : vector<8x256xf32>
    %52 = vector.extract_strided_slice %4 {offsets = [0, 33], sizes = [4, 256], strides = [1, 1]} : vector<4x290xf32> to vector<4x256xf32>
    %53 = vector.extract_strided_slice %2 {offsets = [0, 28], sizes = [8, 4], strides = [1, 1]} : vector<8x36xf32> to vector<8x4xf32>
    %cst_18 = arith.constant dense<0.000000e+00> : vector<8x256xf32>
    %54 = tpu.matmul %53, %52, %cst_18 {dimension_numbers = #tpu.dot_dimension_numbers<[1], [0], [0], [1], [0, 0, 1, 1], [], []>} : vector<8x4xf32>, vector<4x256xf32>, vector<8x256xf32> -> vector<8x256xf32>
    %55 = arith.addf %51, %54 : vector<8x256xf32>
    %56 = vector.extract_strided_slice %4 {offsets = [0, 34], sizes = [4, 256], strides = [1, 1]} : vector<4x290xf32> to vector<4x256xf32>
    %cst_19 = arith.constant 0.000000e+00 : f32
    %57 = vector.broadcast %cst_19 : f32 to vector<4x256xf32>
    %58 = arith.select %10, %56, %57 : vector<4x256xi1>, vector<4x256xf32>
    %59 = vector.extract_strided_slice %2 {offsets = [0, 32], sizes = [8, 4], strides = [1, 1]} : vector<8x36xf32> to vector<8x4xf32>
    %cst_20 = arith.constant dense<0.000000e+00> : vector<8x256xf32>
    %60 = tpu.matmul %59, %58, %cst_20 {dimension_numbers = #tpu.dot_dimension_numbers<[1], [0], [0], [1], [0, 0, 1, 1], [], []>} : vector<8x4xf32>, vector<4x256xf32>, vector<8x256xf32> -> vector<8x256xf32>
    %61 = arith.addf %55, %60 : vector<8x256xf32>
    %c0_21 = arith.constant 0 : index
    %c0_22 = arith.constant 0 : index
    %c0_23 = arith.constant 0 : index
    %62 = vector.load %arg5[%c0_21, %c0_22, %c0_23] : memref<1x8x256xf32, #tpu.memory_space<vmem>>, vector<1x8x256xf32>
    %63 = vector.shape_cast %62 : vector<1x8x256xf32> to vector<8x256xf32>
    %64 = vector.shape_cast %61 : vector<8x256xf32> to vector<1x8x256xf32>
    tpu.vector_store %arg5[%c0_21, %c0_22, %c0_23], %64 {strides = array<i32>} : memref<1x8x256xf32, #tpu.memory_space<vmem>>, vector<1x8x256xf32>,
    return
  }
  func.func @transform_0(%arg0: i32, %arg1: i32) -> (i32, i32, i32) {
    %c0_i32 = arith.constant 0 : i32
    %c0_i32_0 = arith.constant 0 : i32
    %c0_i32_1 = arith.constant 0 : i32
    return %arg0, %c0_i32, %c0_i32_0 : i32, i32, i32
  }
  func.func @transform_1(%arg0: i32, %arg1: i32) -> (i32, i32) {
    %c0_i32 = arith.constant 0 : i32
    %c0_i32_0 = arith.constant 0 : i32
    return %arg1, %c0_i32 : i32, i32
  }
  func.func @transform_2(%arg0: i32, %arg1: i32) -> (i32, i32) {
    %c0_i32 = arith.constant 0 : i32
    %c0_i32_0 = arith.constant 0 : i32
    return %arg1, %c0_i32 : i32, i32
  }
  func.func @transform_3(%arg0: i32, %arg1: i32) -> (i32, i32, i32) {
    %c0_i32 = arith.constant 0 : i32
    %c0_i32_0 = arith.constant 0 : i32
    return %arg0, %arg1, %c0_i32 : i32, i32, i32
  }
}

</mosaic_0001>

<llo_original>
// kernel: tpu_custom_call.1
$region0: #{tpu_custom_call.1}
  #allocation0 [shape = 'u32[]', space=smem, size = 0x4, offset = 0x4, fixed_abs, tag = 'smem constant byte address 0x4 - core index']
  #allocation1 [shape = 'u32[144,128]{1,0:T(1,128)}', space=vmem, size = 0x12000, scoped, tag = 'internal scratch']
  %s0 = inlined_call_operand.hbm [shape: f32[2,4,256], index: 0, kind: input, shape index: {}]
  %s1 = inlined_call_operand.vmem [shape: f32[8,36], index: 1, kind: input, shape index: {}]
  %s2 = inlined_call_operand.vmem [shape: f32[8,1], index: 2, kind: input, shape index: {}]
  %s3 = inlined_call_operand.hbm [shape: f32[2,8,256], index: 3, kind: output, shape index: {}]
  %s4 = sld [smem:[#allocation0]]
  $region49: #{tpu_custom_call.1} parent=0
    _
  %s6 = ssub.s32 1, %s4
  %s7 = scalar_select 0, %s6, %s4
  $region1: #{tpu_custom_call.1} parent=0
    #allocation2 [shape = 'u8[8192]{0}', space=vmem, size = 0x2000, scoped, tag = 'input window, operand 0']
    #allocation3 [shape = 's32[2]{0}', space=sflag, size = 0x8, scoped, tag = 'scoped memory for tpu_custom_call.1']
    #allocation4 [shape = 's32[2]{0}', space=sflag, size = 0x8, scoped, tag = 'scoped memory for tpu_custom_call.1']
    #allocation5 [shape = 'u8[16384]{0}', space=vmem, size = 0x4000, scoped, tag = 'output window, operand 0']
    %8 = vsyncpa [#allocation3], 0
    %s9 = scalar_lea.sflag [#allocation3], 1
    %10 = vsyncpa %s9, 0
    %11 = vsyncpa [#allocation4], 0
    %s12 = scalar_lea.sflag [#allocation4], 1
    %13 = vsyncpa %s12, 0
    loop: start=0, step=1, limit=4
    $region2: #{tpu_custom_call.1} parent=1 // loop_pre_header
      _
    $region3: #{tpu_custom_call.1} parent=1 // loop_header
      %s15 = sphi 0, %s19
      %p16 = scmp.ge.s32.totalorder %s15, 4
      %s22 = sphi 0, %s34
      %s23 = sphi 0, %s30
      %s24 = sphi 0, %s22
      %s25 = sphi 0, %s23
      %s26 = sphi 0, %s24
      %s27 = sphi 0, %s25
      %s37 = sphi 0, %s39
      %s40 = sphi 0, %s37
      %s41 = sphi 0, %s40
      %s57 = sphi 0, %s41
      %s63 = sphi 0, %s65
      %s66 = sphi 0, %s63
      %s67 = sphi 0, %s66
      %s83 = sphi 0, %s67
      %s89 = sphi 0, %s91
      %s92 = sphi 0, %s89
      %s93 = sphi 0, %s92
      %s109 = sphi 0, %s93
      %s117 = sphi 0, %s119
      %s120 = sphi 0, %s117
      %s121 = sphi 0, %s120
      %s137 = sphi 0, %s121
    $region4: #{tpu_custom_call.1} parent=1 // loop_header_branch
      %18 = sbr.rel (%p16) target = $region8
    $region5: #{tpu_custom_call.1} parent=1 // loop_body
      %s20 = ssub.s32 %s15, 1
      %s21 = ssub.s32 %s15, 2
      %s28 = sadd.s32 1, %s23
      %p29 = scmp.ge.s32.totalorder %s28, 1
      %s30 = scalar_select %p29, 0, %s28
      %s31 = sadd.s32 1, %s22
      %s32 = scalar_select %p29, %s31, %s22
      %p33 = scmp.ge.s32.totalorder %s32, 2
      %s34 = scalar_select %p33, 0, %s32
      %s35 = ssub.s32 %s22, %s34
      %p36 = scmp.eq.s32.totalorder %s35, 0
      %s38 = sadd.s32 %s37, 1
      %s39 = scalar_select %p36, %s37, %s38
      %p42 = pneg %p36
      %p43 = scmp.eq.s32.totalorder %s15, 1
      %p44 = por %p42, %p43
      %p45 = scmp.ne.s32.totalorder %s37, %s40
      %p46 = scmp.eq.s32.totalorder %s15, 0
      %p47 = por %p45, %p46
      %p48 = scmp.ne.s32.totalorder %s37, %s40
      %p49 = scmp.eq.s32.totalorder %s20, 1
      %p50 = por %p48, %p49
      %p51 = scmp.ne.s32.totalorder %s40, %s41
      %p52 = scmp.eq.s32.totalorder %s20, 0
      %p53 = por %p51, %p52
      %p54 = scmp.ne.s32.totalorder %s40, %s41
      %p55 = scmp.eq.s32.totalorder %s21, 1
      %p56 = por %p54, %p55
      %p58 = scmp.ne.s32.totalorder %s41, %s57
      %p59 = scmp.eq.s32.totalorder %s21, 0
      %p60 = por %p58, %p59
      %s61 = ssub.s32 %s23, %s30
      %p62 = scmp.eq.s32.totalorder %s61, 0
      %s64 = sadd.s32 %s63, 1
      %s65 = scalar_select %p62, %s63, %s64
      %p68 = pneg %p62
      %p69 = scmp.eq.s32.totalorder %s15, 1
      %p70 = por %p68, %p69
      %p71 = scmp.ne.s32.totalorder %s63, %s66
      %p72 = scmp.eq.s32.totalorder %s15, 0
      %p73 = por %p71, %p72
      %p74 = scmp.ne.s32.totalorder %s63, %s66
      %p75 = scmp.eq.s32.totalorder %s20, 1
      %p76 = por %p74, %p75
      %p77 = scmp.ne.s32.totalorder %s66, %s67
      %p78 = scmp.eq.s32.totalorder %s20, 0
      %p79 = por %p77, %p78
      %p80 = scmp.ne.s32.totalorder %s66, %s67
      %p81 = scmp.eq.s32.totalorder %s21, 1
      %p82 = por %p80, %p81
      %p84 = scmp.ne.s32.totalorder %s67, %s83
      %p85 = scmp.eq.s32.totalorder %s21, 0
      %p86 = por %p84, %p85
      %s87 = ssub.s32 %s23, %s30
      %p88 = scmp.eq.s32.totalorder %s87, 0
      %s90 = sadd.s32 %s89, 1
      %s91 = scalar_select %p88, %s89, %s90
      %p94 = pneg %p88
      %p95 = scmp.eq.s32.totalorder %s15, 1
      %p96 = por %p94, %p95
      %p97 = scmp.ne.s32.totalorder %s89, %s92
      %p98 = scmp.eq.s32.totalorder %s15, 0
      %p99 = por %p97, %p98
      %p100 = scmp.ne.s32.totalorder %s89, %s92
      %p101 = scmp.eq.s32.totalorder %s20, 1
      %p102 = por %p100, %p101
      %p103 = scmp.ne.s32.totalorder %s92, %s93
      %p104 = scmp.eq.s32.totalorder %s20, 0
      %p105 = por %p103, %p104
      %p106 = scmp.ne.s32.totalorder %s92, %s93
      %p107 = scmp.eq.s32.totalorder %s21, 1
      %p108 = por %p106, %p107
      %p110 = scmp.ne.s32.totalorder %s93, %s109
      %p111 = scmp.eq.s32.totalorder %s21, 0
      %p112 = por %p110, %p111
      %s113 = ssub.s32 %s22, %s34
      %s114 = ssub.s32 %s23, %s30
      %s115 = sor.u32 %s113, %s114
      %p116 = scmp.eq.s32.totalorder %s115, 0
      %s118 = sadd.s32 %s117, 1
      %s119 = scalar_select %p116, %s117, %s118
      %p122 = pneg %p116
      %p123 = scmp.eq.s32.totalorder %s15, 1
      %p124 = por %p122, %p123
      %p125 = scmp.ne.s32.totalorder %s117, %s120
      %p126 = scmp.eq.s32.totalorder %s15, 0
      %p127 = por %p125, %p126
      %p128 = scmp.ne.s32.totalorder %s117, %s120
      %p129 = scmp.eq.s32.totalorder %s20, 1
      %p130 = por %p128, %p129
      %p131 = scmp.ne.s32.totalorder %s120, %s121
      %p132 = scmp.eq.s32.totalorder %s20, 0
      %p133 = por %p131, %p132
      %p134 = scmp.ne.s32.totalorder %s120, %s121
      %p135 = scmp.eq.s32.totalorder %s21, 1
      %p136 = por %p134, %p135
      %p138 = scmp.ne.s32.totalorder %s121, %s137
      %p139 = scmp.eq.s32.totalorder %s21, 0
      %p140 = por %p138, %p139
      %p141 = scmp.le.s32.totalorder 1, %s15
      %p142 = scmp.lt.s32.totalorder %s15, 3
      %p143 = pnand %p141, %p142
      %p144 = pneg %p143
      // Predicated region
      $region9: #{tpu_custom_call.1} parent=5 // pred_check
        _
      $region10: #{tpu_custom_call.1} parent=5 // pred_check_branch
        %146 = sbr.rel (%p143) target = $region12
      $region11: #{tpu_custom_call.1} parent=5 // pred_region
        %s147 = ssub.s32 %s15, 1
        // Predicated region
        $region13: #{tpu_custom_call.1} parent=11 // pred_check
          %p148 = pneg %p79
        $region14: #{tpu_custom_call.1} parent=11 // pred_check_branch
          %150 = sbr.rel (%p148) target = $region16
        $region15: #{tpu_custom_call.1} parent=11 // pred_region
          %p151 = scmp.lt.s32.totalorder %s25, 0
          %s152 = scalar_select %p151, %s25, 0
          %s153 = smul.addr %s152, 8
          %s154 = scalar_lea.vmem %s1, %s153
        $region16: #{tpu_custom_call.1} parent=11 // pred_fallthru
          _
        // Predicated region
        $region17: #{tpu_custom_call.1} parent=11 // pred_check
          %p155 = pneg %p105
        $region18: #{tpu_custom_call.1} parent=11 // pred_check_branch
          %157 = sbr.rel (%p155) target = $region20
        $region19: #{tpu_custom_call.1} parent=11 // pred_region
          %p158 = scmp.lt.s32.totalorder %s25, 0
          %s159 = scalar_select %p158, %s25, 0
          %s160 = smul.addr %s159, 8
          %s161 = scalar_lea.vmem %s2, %s160
        $region20: #{tpu_custom_call.1} parent=11 // pred_fallthru
          _
      $region12: #{tpu_custom_call.1} parent=5 // pred_fallthru
        _
      %p162 = scmp.lt.s32.totalorder %s15, 2
      // Predicated region
      $region21: #{tpu_custom_call.1} parent=5 // pred_check
        %p163 = pneg %p162
      $region22: #{tpu_custom_call.1} parent=5 // pred_check_branch
        %165 = sbr.rel (%p163) target = $region24
      $region23: #{tpu_custom_call.1} parent=5 // pred_region
        // Predicated region
        $region25: #{tpu_custom_call.1} parent=23 // pred_check
          %p166 = pneg %p47
        $region26: #{tpu_custom_call.1} parent=23 // pred_check_branch
          %168 = sbr.rel (%p166) target = $region28
        $region27: #{tpu_custom_call.1} parent=23 // pred_region
          %s169 = sand.u32 %s37, 1
          %s170 = scalar_lea.sflag [#allocation3], %s169
          %s171 = sand.u32 %s37, 1
          %s172 = smul.addr %s171, 8
          %s173 = scalar_lea.vmem [#allocation2], %s172
          %s175 = ssub.s32 128, 128
          %176 = vsyncadd %s170, %s175
          %s177 = smul.addr %s22, 2
          %s178 = smul.addr %s177, 64
          %s179 = scalar_lea.hbm %s0, %s178
          %s181 = sshll.u32 %s173, 4
          %s182 = int_to_ptr.vmem [resolvable:$true] %s181
          %184 = dma.hbm_to_vmem [thread:$0]  %s179, 128, %s182, %s170
        $region28: #{tpu_custom_call.1} parent=23 // pred_fallthru
          _
      $region24: #{tpu_custom_call.1} parent=5 // pred_fallthru
        _
      %p185 = scmp.le.s32.totalorder 1, %s15
      %p186 = scmp.lt.s32.totalorder %s15, 3
      %p187 = pnand %p185, %p186
      %p188 = pneg %p187
      // Predicated region
      $region29: #{tpu_custom_call.1} parent=5 // pred_check
        _
      $region30: #{tpu_custom_call.1} parent=5 // pred_check_branch
        %190 = sbr.rel (%p187) target = $region32
      $region31: #{tpu_custom_call.1} parent=5 // pred_region
        %s191 = ssub.s32 %s15, 1
        %s192 = sand.u32 %s40, 1
        %s193 = scalar_lea.sflag [#allocation3], %s192
        %s194 = sand.u32 %s40, 1
        %s195 = smul.addr %s194, 8
        %s196 = scalar_lea.vmem [#allocation2], %s195
        // Predicated region
        $region33: #{tpu_custom_call.1} parent=31 // pred_check
          %p197 = pneg %p53
        $region34: #{tpu_custom_call.1} parent=31 // pred_check_branch
          %199 = sbr.rel (%p197) target = $region36
        $region35: #{tpu_custom_call.1} parent=31 // pred_region
          %200 = dma.done %s193, 128
        $region36: #{tpu_custom_call.1} parent=31 // pred_fallthru
          _
        %s201 = sand.u32 %s40, 1
        %s202 = scalar_lea.sflag [#allocation3], %s201
        %s203 = sand.u32 %s40, 1
        %s204 = smul.addr %s203, 8
        %s205 = scalar_lea.vmem [#allocation2], %s204
        %p206 = pneg %p53
        %p207 = pneg %p50
        %p208 = scmp.lt.s32.totalorder %s25, 0
        %s209 = scalar_select %p208, %s25, 0
        %s210 = smul.addr %s209, 8
        %s211 = scalar_lea.vmem %s1, %s210
        %p212 = pneg %p79
        %p213 = pneg %p76
        %p214 = scmp.lt.s32.totalorder %s25, 0
        %s215 = scalar_select %p214, %s25, 0
        %s216 = smul.addr %s215, 8
        %s217 = scalar_lea.vmem %s2, %s216
        %p218 = pneg %p105
        %p219 = pneg %p102
        %p220 = pneg %p133
        %p221 = pneg %p130
        %s222 = sand.u32 %s120, 1
        %s223 = scalar_lea.sflag [#allocation4], %s222
        %s224 = sand.u32 %s120, 1
        %s225 = smul.addr %s224, 16
        %s226 = scalar_lea.vmem [#allocation5], %s225
        %p227 = scmp.lt.s32.totalorder %s25, 0
        %s228 = scalar_select %p227, %s25, 0
        %s229 = smul.addr %s228, 8
        %s230 = scalar_lea.vmem %s1, %s229
        %p231 = scmp.lt.s32.totalorder %s25, 0
        %s232 = scalar_select %p231, %s25, 0
        %s233 = smul.addr %s232, 8
        %s234 = scalar_lea.vmem %s2, %s233
        %v235 = vld [vmem:[%s196] sm:$0xff]
        %v236 = vld [vmem:[%s230] sm:$0xff]
        %v238 = vcombine.high %v235, %v235
        %239 = vrot.lane.b32.xlu0 %v235, 17
        %v240 = vpop.permute.xlu0 %239
        %241 = vrot.lane.b32.xlu0 %v238, 17
        %v242 = vpop.permute.xlu0 %241
        %vm243 = vcmask 138240
        %v244 = vsel %vm243, %v240, %v242
        %v248 = vsel %vm243, 0.0, %v240
        %v249 = vsel %vm243, %v242, 0.0
        %v250 = vlaneseq
        %v251 = vand.u32 %v250, 127
        %252 = vrot.lane.b32.xlu0 %v251, 16
        %v253 = vpop.permute.xlu0 %252
        %254 = vrot.lane.b32.xlu0 %v251, 32
        %v255 = vpop.permute.xlu0 %254
        %256 = vrot.lane.b32.xlu0 %v251, 48
        %v257 = vpop.permute.xlu0 %256
        %258 = vrot.lane.b32.xlu0 %v251, 64
        %v259 = vpop.permute.xlu0 %258
        %260 = vrot.lane.b32.xlu0 %v251, 80
        %v261 = vpop.permute.xlu0 %260
        %262 = vrot.lane.b32.xlu0 %v251, 96
        %v263 = vpop.permute.xlu0 %262
        %264 = vrot.lane.b32.xlu0 %v251, 112
        %v265 = vpop.permute.xlu0 %264
        %vm266 = vcmask 130048
        %v267 = vsel %vm266, %v251, %v253
        %vm268 = vcmask 261120
        %v269 = vsel %vm268, %v267, %v255
        %vm270 = vcmask 392192
        %v271 = vsel %vm270, %v269, %v257
        %vm272 = vcmask 523264
        %v273 = vsel %vm272, %v271, %v259
        %vm274 = vcmask 654336
        %v275 = vsel %vm274, %v273, %v261
        %vm276 = vcmask 785408
        %v277 = vsel %vm276, %v275, %v263
        %vm278 = vcmask 916480
        %v279 = vsel %vm278, %v277, %v265
        %vm280 = vcmp.ne.s32.totalorder %v279, 0
        %vm281 = vcmp.ne.s32.totalorder %v279, 15
        %v282 = vld [vmem:[%s234] sm:$0xff]
        %284 = vset.pattern.permute.xlu0 0
        %285 = vperm.xlu0 %284, %v282
        %v286 = vpop.permute.xlu0 %285
        %v288 = vsel %vm280, %v248, 0.0
        %v289 = vsel %vm280, %v244, 0.0
        %vm290 = vcmask 31744
        %v292 = vsel %vm290, %v236, 0
        %vm294 = vcmask 1043456
        %v296 = vsel %vm294, %v288, 0
        %v299 = vsel %vm294, %v289, 0
        %301 = vmatprep.subr.mxu0 0.0
        %302 = vmatpush1.msra.mxu0 0.0
        %303 = vmatprep.subr.mxu0 0.0
        %304 = vmatpush1.msra.mxu0 0.0
        %305 = vmatprep.subr.mxu0 0.0
        %306 = vmatpush1.msra.mxu0 0.0
        %307 = vmatprep.subr.mxu0 0.0
        %308 = vmatpush1.msra.mxu0 0.0
        %309 = vmatprep.subr.mxu0 0.0
        %310 = vmatpush1.msra.mxu0 0.0
        %311 = vmatprep.subr.mxu0 0.0
        %312 = vmatpush1.msra.mxu0 0.0
        %313 = vmatprep.subr.mxu0 0.0
        %314 = vmatpush1.msra.mxu0 0.0
        %315 = vmatprep.subr.mxu0 0.0
        %316 = vmatpush1.msra.mxu0 0.0
        %317 = vmatprep.subr.mxu0 0.0
        %318 = vmatpush1.msra.mxu0 0.0
        %319 = vmatprep.subr.mxu0 0.0
        %320 = vmatpush1.msra.mxu0 0.0
        %321 = vmatprep.subr.mxu0 0.0
        %322 = vmatpush1.msra.mxu0 0.0
        %323 = vmatprep.subr.mxu0 0.0
        %324 = vmatpush1.msra.mxu0 0.0
        %325 = vmatprep.subr.mxu0 0.0
        %326 = vmatpush1.msra.mxu0 0.0
        %327 = vmatprep.subr.mxu0 0.0
        %328 = vmatpush1.msra.mxu0 0.0
        %329 = vmatprep.subr.mxu0 0.0
        %330 = vmatpush1.msra.mxu0 0.0
        %331 = vmatprep.subr.mxu0 %v299
        %332 = vmatpush1.msra.mxu0 %v296
        %333 = vmatprep.subr.mxu0 0.0
        %334 = vmatpush2.msra.mxu0 0.0
        %335 = vmatprep.subr.mxu0 0.0
        %336 = vmatpush2.msra.mxu0 0.0
        %337 = vmatprep.subr.mxu0 0.0
        %338 = vmatpush2.msra.mxu0 0.0
        %339 = vmatprep.subr.mxu0 0.0
        %340 = vmatpush2.msra.mxu0 0.0
        %341 = vmatprep.subr.mxu0 0.0
        %342 = vmatpush2.msra.mxu0 0.0
        %343 = vmatprep.subr.mxu0 0.0
        %344 = vmatpush2.msra.mxu0 0.0
        %345 = vmatprep.subr.mxu0 0.0
        %346 = vmatpush2.msra.mxu0 0.0
        %347 = vmatprep.subr.mxu0 0.0
        %348 = vmatpush2.msra.mxu0 0.0
        %349 = vmatprep.subr.mxu0 0.0
        %350 = vmatpush2.msra.mxu0 0.0
        %351 = vmatprep.subr.mxu0 0.0
        %352 = vmatpush2.msra.mxu0 0.0
        %353 = vmatprep.subr.mxu0 0.0
        %354 = vmatpush2.msra.mxu0 0.0
        %355 = vmatprep.subr.mxu0 0.0
        %356 = vmatpush2.msra.mxu0 0.0
        %357 = vmatprep.subr.mxu0 0.0
        %358 = vmatpush2.msra.mxu0 0.0
        %359 = vmatprep.subr.mxu0 0.0
        %360 = vmatpush2.msra.mxu0 0.0
        %361 = vmatprep.subr.mxu0 0.0
        %362 = vmatpush2.msra.mxu0 0.0
        %363 = vmatprep.subr.mxu0 0.0
        %364 = vmatpush2.msra.mxu0 0.0
        %365 = vmatprep.mubr.f32.mxu0 0.0
        %366 = vmatmul.mubr.f32.gmra.mxu0 %v292
        %v367 = vpop.f32.mrf.mxu0
        %v368 = vadd.f32 0.0, %v367
        %v369 = vpop.f32.mrf.mxu0
        %v370 = vadd.f32 0.0, %v369
        %371 = vdwg.mxu0
        %v372 = vadd.f32 %v286, %v368
        %v373 = vadd.f32 %v286, %v370
        %374 = vrot.lane.b32.xlu0 %v236, 124
        %v375 = vpop.permute.xlu0 %374
        %378 = vrot.lane.b32.xlu0 %v248, 127
        %v379 = vpop.permute.xlu0 %378
        %380 = vrot.lane.b32.xlu0 %v244, 127
        %v381 = vpop.permute.xlu0 %380
        %382 = vrot.lane.b32.xlu0 %v249, 127
        %v383 = vpop.permute.xlu0 %382
        %vm384 = vcmask 1039360
        %v385 = vsel %vm384, %v379, %v381
        %v386 = vsel %vm384, %v381, %v383
        %v387 = vsel %vm290, %v375, 0
        %v389 = vsel %vm294, %v385, 0
        %v391 = vsel %vm294, %v386, 0
        %393 = vmatprep.subr.mxu0 0.0
        %394 = vmatpush1.msra.mxu0 0.0
        %395 = vmatprep.subr.mxu0 0.0
        %396 = vmatpush1.msra.mxu0 0.0
        %397 = vmatprep.subr.mxu0 0.0
        %398 = vmatpush1.msra.mxu0 0.0
        %399 = vmatprep.subr.mxu0 0.0
        %400 = vmatpush1.msra.mxu0 0.0
        %401 = vmatprep.subr.mxu0 0.0
        %402 = vmatpush1.msra.mxu0 0.0
        %403 = vmatprep.subr.mxu0 0.0
        %404 = vmatpush1.msra.mxu0 0.0
        %405 = vmatprep.subr.mxu0 0.0
        %406 = vmatpush1.msra.mxu0 0.0
        %407 = vmatprep.subr.mxu0 0.0
        %408 = vmatpush1.msra.mxu0 0.0
        %409 = vmatprep.subr.mxu0 0.0
        %410 = vmatpush1.msra.mxu0 0.0
        %411 = vmatprep.subr.mxu0 0.0
        %412 = vmatpush1.msra.mxu0 0.0
        %413 = vmatprep.subr.mxu0 0.0
        %414 = vmatpush1.msra.mxu0 0.0
        %415 = vmatprep.subr.mxu0 0.0
        %416 = vmatpush1.msra.mxu0 0.0
        %417 = vmatprep.subr.mxu0 0.0
        %418 = vmatpush1.msra.mxu0 0.0
        %419 = vmatprep.subr.mxu0 0.0
        %420 = vmatpush1.msra.mxu0 0.0
        %421 = vmatprep.subr.mxu0 0.0
        %422 = vmatpush1.msra.mxu0 0.0
        %423 = vmatprep.subr.mxu0 %v391
        %424 = vmatpush1.msra.mxu0 %v389
        %425 = vmatprep.subr.mxu0 0.0
        %426 = vmatpush2.msra.mxu0 0.0
        %427 = vmatprep.subr.mxu0 0.0
        %428 = vmatpush2.msra.mxu0 0.0
        %429 = vmatprep.subr.mxu0 0.0
        %430 = vmatpush2.msra.mxu0 0.0
        %431 = vmatprep.subr.mxu0 0.0
        %432 = vmatpush2.msra.mxu0 0.0
        %433 = vmatprep.subr.mxu0 0.0
        %434 = vmatpush2.msra.mxu0 0.0
        %435 = vmatprep.subr.mxu0 0.0
        %436 = vmatpush2.msra.mxu0 0.0
        %437 = vmatprep.subr.mxu0 0.0
        %438 = vmatpush2.msra.mxu0 0.0
        %439 = vmatprep.subr.mxu0 0.0
        %440 = vmatpush2.msra.mxu0 0.0
        %441 = vmatprep.subr.mxu0 0.0
        %442 = vmatpush2.msra.mxu0 0.0
        %443 = vmatprep.subr.mxu0 0.0
        %444 = vmatpush2.msra.mxu0 0.0
        %445 = vmatprep.subr.mxu0 0.0
        %446 = vmatpush2.msra.mxu0 0.0
        %447 = vmatprep.subr.mxu0 0.0
        %448 = vmatpush2.msra.mxu0 0.0
        %449 = vmatprep.subr.mxu0 0.0
        %450 = vmatpush2.msra.mxu0 0.0
        %451 = vmatprep.subr.mxu0 0.0
        %452 = vmatpush2.msra.mxu0 0.0
        %453 = vmatprep.subr.mxu0 0.0
        %454 = vmatpush2.msra.mxu0 0.0
        %455 = vmatprep.subr.mxu0 0.0
        %456 = vmatpush2.msra.mxu0 0.0
        %457 = vmatprep.mubr.f32.mxu0 0.0
        %458 = vmatmul.mubr.f32.gmra.mxu0 %v387
        %v459 = vpop.f32.mrf.mxu0
        %v460 = vadd.f32 0.0, %v459
        %v461 = vpop.f32.mrf.mxu0
        %v462 = vadd.f32 0.0, %v461
        %463 = vdwg.mxu0
        %v464 = vadd.f32 %v372, %v460
        %v465 = vadd.f32 %v373, %v462
        %466 = vrot.lane.b32.xlu0 %v248, 126
        %v467 = vpop.permute.xlu0 %466
        %468 = vrot.lane.b32.xlu0 %v244, 126
        %v469 = vpop.permute.xlu0 %468
        %470 = vrot.lane.b32.xlu0 %v249, 126
        %v471 = vpop.permute.xlu0 %470
        %vm472 = vcmask 1031168
        %v473 = vsel %vm472, %v467, %v469
        %v474 = vsel %vm472, %v469, %v471
        %v477 = vsel %vm281, %v473, 0.0
        %v478 = vsel %vm281, %v474, 0.0
        %479 = vrot.lane.b32.xlu0 %v236, 120
        %v480 = vpop.permute.xlu0 %479
        %v481 = vsel %vm290, %v480, 0
        %v484 = vsel %vm294, %v477, 0
        %v487 = vsel %vm294, %v478, 0
        %489 = vmatprep.subr.mxu0 0.0
        %490 = vmatpush1.msra.mxu0 0.0
        %491 = vmatprep.subr.mxu0 0.0
        %492 = vmatpush1.msra.mxu0 0.0
        %493 = vmatprep.subr.mxu0 0.0
        %494 = vmatpush1.msra.mxu0 0.0
        %495 = vmatprep.subr.mxu0 0.0
        %496 = vmatpush1.msra.mxu0 0.0
        %497 = vmatprep.subr.mxu0 0.0
        %498 = vmatpush1.msra.mxu0 0.0
        %499 = vmatprep.subr.mxu0 0.0
        %500 = vmatpush1.msra.mxu0 0.0
        %501 = vmatprep.subr.mxu0 0.0
        %502 = vmatpush1.msra.mxu0 0.0
        %503 = vmatprep.subr.mxu0 0.0
        %504 = vmatpush1.msra.mxu0 0.0
        %505 = vmatprep.subr.mxu0 0.0
        %506 = vmatpush1.msra.mxu0 0.0
        %507 = vmatprep.subr.mxu0 0.0
        %508 = vmatpush1.msra.mxu0 0.0
        %509 = vmatprep.subr.mxu0 0.0
        %510 = vmatpush1.msra.mxu0 0.0
        %511 = vmatprep.subr.mxu0 0.0
        %512 = vmatpush1.msra.mxu0 0.0
        %513 = vmatprep.subr.mxu0 0.0
        %514 = vmatpush1.msra.mxu0 0.0
        %515 = vmatprep.subr.mxu0 0.0
        %516 = vmatpush1.msra.mxu0 0.0
        %517 = vmatprep.subr.mxu0 0.0
        %518 = vmatpush1.msra.mxu0 0.0
        %519 = vmatprep.subr.mxu0 %v487
        %520 = vmatpush1.msra.mxu0 %v484
        %521 = vmatprep.subr.mxu0 0.0
        %522 = vmatpush2.msra.mxu0 0.0
        %523 = vmatprep.subr.mxu0 0.0
        %524 = vmatpush2.msra.mxu0 0.0
        %525 = vmatprep.subr.mxu0 0.0
        %526 = vmatpush2.msra.mxu0 0.0
        %527 = vmatprep.subr.mxu0 0.0
        %528 = vmatpush2.msra.mxu0 0.0
        %529 = vmatprep.subr.mxu0 0.0
        %530 = vmatpush2.msra.mxu0 0.0
        %531 = vmatprep.subr.mxu0 0.0
        %532 = vmatpush2.msra.mxu0 0.0
        %533 = vmatprep.subr.mxu0 0.0
        %534 = vmatpush2.msra.mxu0 0.0
        %535 = vmatprep.subr.mxu0 0.0
        %536 = vmatpush2.msra.mxu0 0.0
        %537 = vmatprep.subr.mxu0 0.0
        %538 = vmatpush2.msra.mxu0 0.0
        %539 = vmatprep.subr.mxu0 0.0
        %540 = vmatpush2.msra.mxu0 0.0
        %541 = vmatprep.subr.mxu0 0.0
        %542 = vmatpush2.msra.mxu0 0.0
        %543 = vmatprep.subr.mxu0 0.0
        %544 = vmatpush2.msra.mxu0 0.0
        %545 = vmatprep.subr.mxu0 0.0
        %546 = vmatpush2.msra.mxu0 0.0
        %547 = vmatprep.subr.mxu0 0.0
        %548 = vmatpush2.msra.mxu0 0.0
        %549 = vmatprep.subr.mxu0 0.0
        %550 = vmatpush2.msra.mxu0 0.0
        %551 = vmatprep.subr.mxu0 0.0
        %552 = vmatpush2.msra.mxu0 0.0
        %553 = vmatprep.mubr.f32.mxu0 0.0
        %554 = vmatmul.mubr.f32.gmra.mxu0 %v481
        %v555 = vpop.f32.mrf.mxu0
        %v556 = vadd.f32 0.0, %v555
        %v557 = vpop.f32.mrf.mxu0
        %v558 = vadd.f32 0.0, %v557
        %559 = vdwg.mxu0
        %v560 = vadd.f32 %v464, %v556
        %v561 = vadd.f32 %v465, %v558
        %562 = vrot.lane.b32.xlu0 %v248, 112
        %v563 = vpop.permute.xlu0 %562
        %564 = vrot.lane.b32.xlu0 %v244, 112
        %v565 = vpop.permute.xlu0 %564
        %566 = vrot.lane.b32.xlu0 %v249, 112
        %v567 = vpop.permute.xlu0 %566
        %v568 = vsel %vm278, %v563, %v565
        %v569 = vsel %vm278, %v565, %v567
        %v572 = vsel %vm280, %v568, 0.0
        %v573 = vsel %vm280, %v569, 0.0
        %574 = vrot.lane.b32.xlu0 %v236, 116
        %v575 = vpop.permute.xlu0 %574
        %v576 = vsel %vm290, %v575, 0
        %v579 = vsel %vm294, %v572, 0
        %v582 = vsel %vm294, %v573, 0
        %584 = vmatprep.subr.mxu0 0.0
        %585 = vmatpush1.msra.mxu0 0.0
        %586 = vmatprep.subr.mxu0 0.0
        %587 = vmatpush1.msra.mxu0 0.0
        %588 = vmatprep.subr.mxu0 0.0
        %589 = vmatpush1.msra.mxu0 0.0
        %590 = vmatprep.subr.mxu0 0.0
        %591 = vmatpush1.msra.mxu0 0.0
        %592 = vmatprep.subr.mxu0 0.0
        %593 = vmatpush1.msra.mxu0 0.0
        %594 = vmatprep.subr.mxu0 0.0
        %595 = vmatpush1.msra.mxu0 0.0
        %596 = vmatprep.subr.mxu0 0.0
        %597 = vmatpush1.msra.mxu0 0.0
        %598 = vmatprep.subr.mxu0 0.0
        %599 = vmatpush1.msra.mxu0 0.0
        %600 = vmatprep.subr.mxu0 0.0
        %601 = vmatpush1.msra.mxu0 0.0
        %602 = vmatprep.subr.mxu0 0.0
        %603 = vmatpush1.msra.mxu0 0.0
        %604 = vmatprep.subr.mxu0 0.0
        %605 = vmatpush1.msra.mxu0 0.0
        %606 = vmatprep.subr.mxu0 0.0
        %607 = vmatpush1.msra.mxu0 0.0
        %608 = vmatprep.subr.mxu0 0.0
        %609 = vmatpush1.msra.mxu0 0.0
        %610 = vmatprep.subr.mxu0 0.0
        %611 = vmatpush1.msra.mxu0 0.0
        %612 = vmatprep.subr.mxu0 0.0
        %613 = vmatpush1.msra.mxu0 0.0
        %614 = vmatprep.subr.mxu0 %v582
        %615 = vmatpush1.msra.mxu0 %v579
        %616 = vmatprep.subr.mxu0 0.0
        %617 = vmatpush2.msra.mxu0 0.0
        %618 = vmatprep.subr.mxu0 0.0
        %619 = vmatpush2.msra.mxu0 0.0
        %620 = vmatprep.subr.mxu0 0.0
        %621 = vmatpush2.msra.mxu0 0.0
        %622 = vmatprep.subr.mxu0 0.0
        %623 = vmatpush2.msra.mxu0 0.0
        %624 = vmatprep.subr.mxu0 0.0
        %625 = vmatpush2.msra.mxu0 0.0
        %626 = vmatprep.subr.mxu0 0.0
        %627 = vmatpush2.msra.mxu0 0.0
        %628 = vmatprep.subr.mxu0 0.0
        %629 = vmatpush2.msra.mxu0 0.0
        %630 = vmatprep.subr.mxu0 0.0
        %631 = vmatpush2.msra.mxu0 0.0
        %632 = vmatprep.subr.mxu0 0.0
        %633 = vmatpush2.msra.mxu0 0.0
        %634 = vmatprep.subr.mxu0 0.0
        %635 = vmatpush2.msra.mxu0 0.0
        %636 = vmatprep.subr.mxu0 0.0
        %637 = vmatpush2.msra.mxu0 0.0
        %638 = vmatprep.subr.mxu0 0.0
        %639 = vmatpush2.msra.mxu0 0.0
        %640 = vmatprep.subr.mxu0 0.0
        %641 = vmatpush2.msra.mxu0 0.0
        %642 = vmatprep.subr.mxu0 0.0
        %643 = vmatpush2.msra.mxu0 0.0
        %644 = vmatprep.subr.mxu0 0.0
        %645 = vmatpush2.msra.mxu0 0.0
        %646 = vmatprep.subr.mxu0 0.0
        %647 = vmatpush2.msra.mxu0 0.0
        %648 = vmatprep.mubr.f32.mxu0 0.0
        %649 = vmatmul.mubr.f32.gmra.mxu0 %v576
        %v650 = vpop.f32.mrf.mxu0
        %v651 = vadd.f32 0.0, %v650
        %v652 = vpop.f32.mrf.mxu0
        %v653 = vadd.f32 0.0, %v652
        %654 = vdwg.mxu0
        %v655 = vadd.f32 %v560, %v651
        %v656 = vadd.f32 %v561, %v653
        %657 = vrot.lane.b32.xlu0 %v236, 112
        %v658 = vpop.permute.xlu0 %657
        %659 = vrot.lane.b32.xlu0 %v248, 111
        %v660 = vpop.permute.xlu0 %659
        %661 = vrot.lane.b32.xlu0 %v244, 111
        %v662 = vpop.permute.xlu0 %661
        %663 = vrot.lane.b32.xlu0 %v249, 111
        %v664 = vpop.permute.xlu0 %663
        %vm665 = vcmask 908288
        %v666 = vsel %vm665, %v660, %v662
        %v667 = vsel %vm665, %v662, %v664
        %v668 = vsel %vm290, %v658, 0
        %v670 = vsel %vm294, %v666, 0
        %v672 = vsel %vm294, %v667, 0
        %674 = vmatprep.subr.mxu0 0.0
        %675 = vmatpush1.msra.mxu0 0.0
        %676 = vmatprep.subr.mxu0 0.0
        %677 = vmatpush1.msra.mxu0 0.0
        %678 = vmatprep.subr.mxu0 0.0
        %679 = vmatpush1.msra.mxu0 0.0
        %680 = vmatprep.subr.mxu0 0.0
        %681 = vmatpush1.msra.mxu0 0.0
        %682 = vmatprep.subr.mxu0 0.0
        %683 = vmatpush1.msra.mxu0 0.0
        %684 = vmatprep.subr.mxu0 0.0
        %685 = vmatpush1.msra.mxu0 0.0
        %686 = vmatprep.subr.mxu0 0.0
        %687 = vmatpush1.msra.mxu0 0.0
        %688 = vmatprep.subr.mxu0 0.0
        %689 = vmatpush1.msra.mxu0 0.0
        %690 = vmatprep.subr.mxu0 0.0
        %691 = vmatpush1.msra.mxu0 0.0
        %692 = vmatprep.subr.mxu0 0.0
        %693 = vmatpush1.msra.mxu0 0.0
        %694 = vmatprep.subr.mxu0 0.0
        %695 = vmatpush1.msra.mxu0 0.0
        %696 = vmatprep.subr.mxu0 0.0
        %697 = vmatpush1.msra.mxu0 0.0
        %698 = vmatprep.subr.mxu0 0.0
        %699 = vmatpush1.msra.mxu0 0.0
        %700 = vmatprep.subr.mxu0 0.0
        %701 = vmatpush1.msra.mxu0 0.0
        %702 = vmatprep.subr.mxu0 0.0
        %703 = vmatpush1.msra.mxu0 0.0
        %704 = vmatprep.subr.mxu0 %v672
        %705 = vmatpush1.msra.mxu0 %v670
        %706 = vmatprep.subr.mxu0 0.0
        %707 = vmatpush2.msra.mxu0 0.0
        %708 = vmatprep.subr.mxu0 0.0
        %709 = vmatpush2.msra.mxu0 0.0
        %710 = vmatprep.subr.mxu0 0.0
        %711 = vmatpush2.msra.mxu0 0.0
        %712 = vmatprep.subr.mxu0 0.0
        %713 = vmatpush2.msra.mxu0 0.0
        %714 = vmatprep.subr.mxu0 0.0
        %715 = vmatpush2.msra.mxu0 0.0
        %716 = vmatprep.subr.mxu0 0.0
        %717 = vmatpush2.msra.mxu0 0.0
        %718 = vmatprep.subr.mxu0 0.0
        %719 = vmatpush2.msra.mxu0 0.0
        %720 = vmatprep.subr.mxu0 0.0
        %721 = vmatpush2.msra.mxu0 0.0
        %722 = vmatprep.subr.mxu0 0.0
        %723 = vmatpush2.msra.mxu0 0.0
        %724 = vmatprep.subr.mxu0 0.0
        %725 = vmatpush2.msra.mxu0 0.0
        %726 = vmatprep.subr.mxu0 0.0
        %727 = vmatpush2.msra.mxu0 0.0
        %728 = vmatprep.subr.mxu0 0.0
        %729 = vmatpush2.msra.mxu0 0.0
        %730 = vmatprep.subr.mxu0 0.0
        %731 = vmatpush2.msra.mxu0 0.0
        %732 = vmatprep.subr.mxu0 0.0
        %733 = vmatpush2.msra.mxu0 0.0
        %734 = vmatprep.subr.mxu0 0.0
        %735 = vmatpush2.msra.mxu0 0.0
        %736 = vmatprep.subr.mxu0 0.0
        %737 = vmatpush2.msra.mxu0 0.0
        %738 = vmatprep.mubr.f32.mxu0 0.0
        %739 = vmatmul.mubr.f32.gmra.mxu0 %v668
        %v740 = vpop.f32.mrf.mxu0
        %v741 = vadd.f32 0.0, %v740
        %v742 = vpop.f32.mrf.mxu0
        %v743 = vadd.f32 0.0, %v742
        %744 = vdwg.mxu0
        %v745 = vadd.f32 %v655, %v741
        %v746 = vadd.f32 %v656, %v743
        %747 = vrot.lane.b32.xlu0 %v248, 110
        %v748 = vpop.permute.xlu0 %747
        %749 = vrot.lane.b32.xlu0 %v244, 110
        %v750 = vpop.permute.xlu0 %749
        %751 = vrot.lane.b32.xlu0 %v249, 110
        %v752 = vpop.permute.xlu0 %751
        %vm753 = vcmask 900096
        %v754 = vsel %vm753, %v748, %v750
        %v755 = vsel %vm753, %v750, %v752
        %v758 = vsel %vm281, %v754, 0.0
        %v759 = vsel %vm281, %v755, 0.0
        %760 = vrot.lane.b32.xlu0 %v236, 108
        %v761 = vpop.permute.xlu0 %760
        %v762 = vsel %vm290, %v761, 0
        %v765 = vsel %vm294, %v758, 0
        %v768 = vsel %vm294, %v759, 0
        %770 = vmatprep.subr.mxu0 0.0
        %771 = vmatpush1.msra.mxu0 0.0
        %772 = vmatprep.subr.mxu0 0.0
        %773 = vmatpush1.msra.mxu0 0.0
        %774 = vmatprep.subr.mxu0 0.0
        %775 = vmatpush1.msra.mxu0 0.0
        %776 = vmatprep.subr.mxu0 0.0
        %777 = vmatpush1.msra.mxu0 0.0
        %778 = vmatprep.subr.mxu0 0.0
        %779 = vmatpush1.msra.mxu0 0.0
        %780 = vmatprep.subr.mxu0 0.0
        %781 = vmatpush1.msra.mxu0 0.0
        %782 = vmatprep.subr.mxu0 0.0
        %783 = vmatpush1.msra.mxu0 0.0
        %784 = vmatprep.subr.mxu0 0.0
        %785 = vmatpush1.msra.mxu0 0.0
        %786 = vmatprep.subr.mxu0 0.0
        %787 = vmatpush1.msra.mxu0 0.0
        %788 = vmatprep.subr.mxu0 0.0
        %789 = vmatpush1.msra.mxu0 0.0
        %790 = vmatprep.subr.mxu0 0.0
        %791 = vmatpush1.msra.mxu0 0.0
        %792 = vmatprep.subr.mxu0 0.0
        %793 = vmatpush1.msra.mxu0 0.0
        %794 = vmatprep.subr.mxu0 0.0
        %795 = vmatpush1.msra.mxu0 0.0
        %796 = vmatprep.subr.mxu0 0.0
        %797 = vmatpush1.msra.mxu0 0.0
        %798 = vmatprep.subr.mxu0 0.0
        %799 = vmatpush1.msra.mxu0 0.0
        %800 = vmatprep.subr.mxu0 %v768
        %801 = vmatpush1.msra.mxu0 %v765
        %802 = vmatprep.subr.mxu0 0.0
        %803 = vmatpush2.msra.mxu0 0.0
        %804 = vmatprep.subr.mxu0 0.0
        %805 = vmatpush2.msra.mxu0 0.0
        %806 = vmatprep.subr.mxu0 0.0
        %807 = vmatpush2.msra.mxu0 0.0
        %808 = vmatprep.subr.mxu0 0.0
        %809 = vmatpush2.msra.mxu0 0.0
        %810 = vmatprep.subr.mxu0 0.0
        %811 = vmatpush2.msra.mxu0 0.0
        %812 = vmatprep.subr.mxu0 0.0
        %813 = vmatpush2.msra.mxu0 0.0
        %814 = vmatprep.subr.mxu0 0.0
        %815 = vmatpush2.msra.mxu0 0.0
        %816 = vmatprep.subr.mxu0 0.0
        %817 = vmatpush2.msra.mxu0 0.0
        %818 = vmatprep.subr.mxu0 0.0
        %819 = vmatpush2.msra.mxu0 0.0
        %820 = vmatprep.subr.mxu0 0.0
        %821 = vmatpush2.msra.mxu0 0.0
        %822 = vmatprep.subr.mxu0 0.0
        %823 = vmatpush2.msra.mxu0 0.0
        %824 = vmatprep.subr.mxu0 0.0
        %825 = vmatpush2.msra.mxu0 0.0
        %826 = vmatprep.subr.mxu0 0.0
        %827 = vmatpush2.msra.mxu0 0.0
        %828 = vmatprep.subr.mxu0 0.0
        %829 = vmatpush2.msra.mxu0 0.0
        %830 = vmatprep.subr.mxu0 0.0
        %831 = vmatpush2.msra.mxu0 0.0
        %832 = vmatprep.subr.mxu0 0.0
        %833 = vmatpush2.msra.mxu0 0.0
        %834 = vmatprep.mubr.f32.mxu0 0.0
        %835 = vmatmul.mubr.f32.gmra.mxu0 %v762
        %v836 = vpop.f32.mrf.mxu0
        %v837 = vadd.f32 0.0, %v836
        %v838 = vpop.f32.mrf.mxu0
        %v839 = vadd.f32 0.0, %v838
        %840 = vdwg.mxu0
        %v841 = vadd.f32 %v745, %v837
        %v842 = vadd.f32 %v746, %v839
        %843 = vrot.lane.b32.xlu0 %v248, 96
        %v844 = vpop.permute.xlu0 %843
        %845 = vrot.lane.b32.xlu0 %v244, 96
        %v846 = vpop.permute.xlu0 %845
        %847 = vrot.lane.b32.xlu0 %v249, 96
        %v848 = vpop.permute.xlu0 %847
        %v849 = vsel %vm276, %v844, %v846
        %v850 = vsel %vm276, %v846, %v848
        %v853 = vsel %vm280, %v849, 0.0
        %v854 = vsel %vm280, %v850, 0.0
        %855 = vrot.lane.b32.xlu0 %v236, 104
        %v856 = vpop.permute.xlu0 %855
        %v857 = vsel %vm290, %v856, 0
        %v860 = vsel %vm294, %v853, 0
        %v863 = vsel %vm294, %v854, 0
        %865 = vmatprep.subr.mxu0 0.0
        %866 = vmatpush1.msra.mxu0 0.0
        %867 = vmatprep.subr.mxu0 0.0
        %868 = vmatpush1.msra.mxu0 0.0
        %869 = vmatprep.subr.mxu0 0.0
        %870 = vmatpush1.msra.mxu0 0.0
        %871 = vmatprep.subr.mxu0 0.0
        %872 = vmatpush1.msra.mxu0 0.0
        %873 = vmatprep.subr.mxu0 0.0
        %874 = vmatpush1.msra.mxu0 0.0
        %875 = vmatprep.subr.mxu0 0.0
        %876 = vmatpush1.msra.mxu0 0.0
        %877 = vmatprep.subr.mxu0 0.0
        %878 = vmatpush1.msra.mxu0 0.0
        %879 = vmatprep.subr.mxu0 0.0
        %880 = vmatpush1.msra.mxu0 0.0
        %881 = vmatprep.subr.mxu0 0.0
        %882 = vmatpush1.msra.mxu0 0.0
        %883 = vmatprep.subr.mxu0 0.0
        %884 = vmatpush1.msra.mxu0 0.0
        %885 = vmatprep.subr.mxu0 0.0
        %886 = vmatpush1.msra.mxu0 0.0
        %887 = vmatprep.subr.mxu0 0.0
        %888 = vmatpush1.msra.mxu0 0.0
        %889 = vmatprep.subr.mxu0 0.0
        %890 = vmatpush1.msra.mxu0 0.0
        %891 = vmatprep.subr.mxu0 0.0
        %892 = vmatpush1.msra.mxu0 0.0
        %893 = vmatprep.subr.mxu0 0.0
        %894 = vmatpush1.msra.mxu0 0.0
        %895 = vmatprep.subr.mxu0 %v863
        %896 = vmatpush1.msra.mxu0 %v860
        %897 = vmatprep.subr.mxu0 0.0
        %898 = vmatpush2.msra.mxu0 0.0
        %899 = vmatprep.subr.mxu0 0.0
        %900 = vmatpush2.msra.mxu0 0.0
        %901 = vmatprep.subr.mxu0 0.0
        %902 = vmatpush2.msra.mxu0 0.0
        %903 = vmatprep.subr.mxu0 0.0
        %904 = vmatpush2.msra.mxu0 0.0
        %905 = vmatprep.subr.mxu0 0.0
        %906 = vmatpush2.msra.mxu0 0.0
        %907 = vmatprep.subr.mxu0 0.0
        %908 = vmatpush2.msra.mxu0 0.0
        %909 = vmatprep.subr.mxu0 0.0
        %910 = vmatpush2.msra.mxu0 0.0
        %911 = vmatprep.subr.mxu0 0.0
        %912 = vmatpush2.msra.mxu0 0.0
        %913 = vmatprep.subr.mxu0 0.0
        %914 = vmatpush2.msra.mxu0 0.0
        %915 = vmatprep.subr.mxu0 0.0
        %916 = vmatpush2.msra.mxu0 0.0
        %917 = vmatprep.subr.mxu0 0.0
        %918 = vmatpush2.msra.mxu0 0.0
        %919 = vmatprep.subr.mxu0 0.0
        %920 = vmatpush2.msra.mxu0 0.0
        %921 = vmatprep.subr.mxu0 0.0
        %922 = vmatpush2.msra.mxu0 0.0
        %923 = vmatprep.subr.mxu0 0.0
        %924 = vmatpush2.msra.mxu0 0.0
        %925 = vmatprep.subr.mxu0 0.0
        %926 = vmatpush2.msra.mxu0 0.0
        %927 = vmatprep.subr.mxu0 0.0
        %928 = vmatpush2.msra.mxu0 0.0
        %929 = vmatprep.mubr.f32.mxu0 0.0
        %930 = vmatmul.mubr.f32.gmra.mxu0 %v857
        %v931 = vpop.f32.mrf.mxu0
        %v932 = vadd.f32 0.0, %v931
        %v933 = vpop.f32.mrf.mxu0
        %v934 = vadd.f32 0.0, %v933
        %935 = vdwg.mxu0
        %v936 = vadd.f32 %v841, %v932
        %v937 = vadd.f32 %v842, %v934
        %938 = vrot.lane.b32.xlu0 %v236, 100
        %v939 = vpop.permute.xlu0 %938
        %940 = vrot.lane.b32.xlu0 %v248, 95
        %v941 = vpop.permute.xlu0 %940
        %942 = vrot.lane.b32.xlu0 %v244, 95
        %v943 = vpop.permute.xlu0 %942
        %944 = vrot.lane.b32.xlu0 %v249, 95
        %v945 = vpop.permute.xlu0 %944
        %vm946 = vcmask 777216
        %v947 = vsel %vm946, %v941, %v943
        %v948 = vsel %vm946, %v943, %v945
        %v949 = vsel %vm290, %v939, 0
        %v951 = vsel %vm294, %v947, 0
        %v953 = vsel %vm294, %v948, 0
        %955 = vmatprep.subr.mxu0 0.0
        %956 = vmatpush1.msra.mxu0 0.0
        %957 = vmatprep.subr.mxu0 0.0
        %958 = vmatpush1.msra.mxu0 0.0
        %959 = vmatprep.subr.mxu0 0.0
        %960 = vmatpush1.msra.mxu0 0.0
        %961 = vmatprep.subr.mxu0 0.0
        %962 = vmatpush1.msra.mxu0 0.0
        %963 = vmatprep.subr.mxu0 0.0
        %964 = vmatpush1.msra.mxu0 0.0
        %965 = vmatprep.subr.mxu0 0.0
        %966 = vmatpush1.msra.mxu0 0.0
        %967 = vmatprep.subr.mxu0 0.0
        %968 = vmatpush1.msra.mxu0 0.0
        %969 = vmatprep.subr.mxu0 0.0
        %970 = vmatpush1.msra.mxu0 0.0
        %971 = vmatprep.subr.mxu0 0.0
        %972 = vmatpush1.msra.mxu0 0.0
        %973 = vmatprep.subr.mxu0 0.0
        %974 = vmatpush1.msra.mxu0 0.0
        %975 = vmatprep.subr.mxu0 0.0
        %976 = vmatpush1.msra.mxu0 0.0
        %977 = vmatprep.subr.mxu0 0.0
        %978 = vmatpush1.msra.mxu0 0.0
        %979 = vmatprep.subr.mxu0 0.0
        %980 = vmatpush1.msra.mxu0 0.0
        %981 = vmatprep.subr.mxu0 0.0
        %982 = vmatpush1.msra.mxu0 0.0
        %983 = vmatprep.subr.mxu0 0.0
        %984 = vmatpush1.msra.mxu0 0.0
        %985 = vmatprep.subr.mxu0 %v953
        %986 = vmatpush1.msra.mxu0 %v951
        %987 = vmatprep.subr.mxu0 0.0
        %988 = vmatpush2.msra.mxu0 0.0
        %989 = vmatprep.subr.mxu0 0.0
        %990 = vmatpush2.msra.mxu0 0.0
        %991 = vmatprep.subr.mxu0 0.0
        %992 = vmatpush2.msra.mxu0 0.0
        %993 = vmatprep.subr.mxu0 0.0
        %994 = vmatpush2.msra.mxu0 0.0
        %995 = vmatprep.subr.mxu0 0.0
        %996 = vmatpush2.msra.mxu0 0.0
        %997 = vmatprep.subr.mxu0 0.0
        %998 = vmatpush2.msra.mxu0 0.0
        %999 = vmatprep.subr.mxu0 0.0
        %1000 = vmatpush2.msra.mxu0 0.0
        %1001 = vmatprep.subr.mxu0 0.0
        %1002 = vmatpush2.msra.mxu0 0.0
        %1003 = vmatprep.subr.mxu0 0.0
        %1004 = vmatpush2.msra.mxu0 0.0
        %1005 = vmatprep.subr.mxu0 0.0
        %1006 = vmatpush2.msra.mxu0 0.0
        %1007 = vmatprep.subr.mxu0 0.0
        %1008 = vmatpush2.msra.mxu0 0.0
        %1009 = vmatprep.subr.mxu0 0.0
        %1010 = vmatpush2.msra.mxu0 0.0
        %1011 = vmatprep.subr.mxu0 0.0
        %1012 = vmatpush2.msra.mxu0 0.0
        %1013 = vmatprep.subr.mxu0 0.0
        %1014 = vmatpush2.msra.mxu0 0.0
        %1015 = vmatprep.subr.mxu0 0.0
        %1016 = vmatpush2.msra.mxu0 0.0
        %1017 = vmatprep.subr.mxu0 0.0
        %1018 = vmatpush2.msra.mxu0 0.0
        %1019 = vmatprep.mubr.f32.mxu0 0.0
        %1020 = vmatmul.mubr.f32.gmra.mxu0 %v949
        %v1021 = vpop.f32.mrf.mxu0
        %v1022 = vadd.f32 0.0, %v1021
        %v1023 = vpop.f32.mrf.mxu0
        %v1024 = vadd.f32 0.0, %v1023
        %1025 = vdwg.mxu0
        %v1026 = vadd.f32 %v936, %v1022
        %v1027 = vadd.f32 %v937, %v1024
        %1028 = vrot.lane.b32.xlu0 %v248, 94
        %v1029 = vpop.permute.xlu0 %1028
        %1030 = vrot.lane.b32.xlu0 %v244, 94
        %v1031 = vpop.permute.xlu0 %1030
        %1032 = vrot.lane.b32.xlu0 %v249, 94
        %v1033 = vpop.permute.xlu0 %1032
        %vm1034 = vcmask 769024
        %v1035 = vsel %vm1034, %v1029, %v1031
        %v1036 = vsel %vm1034, %v1031, %v1033
        %v1039 = vsel %vm281, %v1035, 0.0
        %v1040 = vsel %vm281, %v1036, 0.0
        %1041 = vrot.lane.b32.xlu0 %v236, 96
        %v1042 = vpop.permute.xlu0 %1041
        %v1043 = vsel %vm290, %v1042, 0
        %v1046 = vsel %vm294, %v1039, 0
        %v1049 = vsel %vm294, %v1040, 0
        %1051 = vmatprep.subr.mxu0 0.0
        %1052 = vmatpush1.msra.mxu0 0.0
        %1053 = vmatprep.subr.mxu0 0.0
        %1054 = vmatpush1.msra.mxu0 0.0
        %1055 = vmatprep.subr.mxu0 0.0
        %1056 = vmatpush1.msra.mxu0 0.0
        %1057 = vmatprep.subr.mxu0 0.0
        %1058 = vmatpush1.msra.mxu0 0.0
        %1059 = vmatprep.subr.mxu0 0.0
        %1060 = vmatpush1.msra.mxu0 0.0
        %1061 = vmatprep.subr.mxu0 0.0
        %1062 = vmatpush1.msra.mxu0 0.0
        %1063 = vmatprep.subr.mxu0 0.0
        %1064 = vmatpush1.msra.mxu0 0.0
        %1065 = vmatprep.subr.mxu0 0.0
        %1066 = vmatpush1.msra.mxu0 0.0
        %1067 = vmatprep.subr.mxu0 0.0
        %1068 = vmatpush1.msra.mxu0 0.0
        %1069 = vmatprep.subr.mxu0 0.0
        %1070 = vmatpush1.msra.mxu0 0.0
        %1071 = vmatprep.subr.mxu0 0.0
        %1072 = vmatpush1.msra.mxu0 0.0
        %1073 = vmatprep.subr.mxu0 0.0
        %1074 = vmatpush1.msra.mxu0 0.0
        %1075 = vmatprep.subr.mxu0 0.0
        %1076 = vmatpush1.msra.mxu0 0.0
        %1077 = vmatprep.subr.mxu0 0.0
        %1078 = vmatpush1.msra.mxu0 0.0
        %1079 = vmatprep.subr.mxu0 0.0
        %1080 = vmatpush1.msra.mxu0 0.0
        %1081 = vmatprep.subr.mxu0 %v1049
        %1082 = vmatpush1.msra.mxu0 %v1046
        %1083 = vmatprep.subr.mxu0 0.0
        %1084 = vmatpush2.msra.mxu0 0.0
        %1085 = vmatprep.subr.mxu0 0.0
        %1086 = vmatpush2.msra.mxu0 0.0
        %1087 = vmatprep.subr.mxu0 0.0
        %1088 = vmatpush2.msra.mxu0 0.0
        %1089 = vmatprep.subr.mxu0 0.0
        %1090 = vmatpush2.msra.mxu0 0.0
        %1091 = vmatprep.subr.mxu0 0.0
        %1092 = vmatpush2.msra.mxu0 0.0
        %1093 = vmatprep.subr.mxu0 0.0
        %1094 = vmatpush2.msra.mxu0 0.0
        %1095 = vmatprep.subr.mxu0 0.0
        %1096 = vmatpush2.msra.mxu0 0.0
        %1097 = vmatprep.subr.mxu0 0.0
        %1098 = vmatpush2.msra.mxu0 0.0
        %1099 = vmatprep.subr.mxu0 0.0
        %1100 = vmatpush2.msra.mxu0 0.0
        %1101 = vmatprep.subr.mxu0 0.0
        %1102 = vmatpush2.msra.mxu0 0.0
        %1103 = vmatprep.subr.mxu0 0.0
        %1104 = vmatpush2.msra.mxu0 0.0
        %1105 = vmatprep.subr.mxu0 0.0
        %1106 = vmatpush2.msra.mxu0 0.0
        %1107 = vmatprep.subr.mxu0 0.0
        %1108 = vmatpush2.msra.mxu0 0.0
        %1109 = vmatprep.subr.mxu0 0.0
        %1110 = vmatpush2.msra.mxu0 0.0
        %1111 = vmatprep.subr.mxu0 0.0
        %1112 = vmatpush2.msra.mxu0 0.0
        %1113 = vmatprep.subr.mxu0 0.0
        %1114 = vmatpush2.msra.mxu0 0.0
        %1115 = vmatprep.mubr.f32.mxu0 0.0
        %1116 = vmatmul.mubr.f32.gmra.mxu0 %v1043
        %v1117 = vpop.f32.mrf.mxu0
        %v1118 = vadd.f32 0.0, %v1117
        %v1119 = vpop.f32.mrf.mxu0
        %v1120 = vadd.f32 0.0, %v1119
        %1121 = vdwg.mxu0
        %v1122 = vadd.f32 %v1026, %v1118
        %v1123 = vadd.f32 %v1027, %v1120
        %1124 = vst [vmem:[%s226] sm:$0xff] %v1122
        %1125 = vst [vmem:[%s226 + $0x8] sm:$0xff] %v1123
        %s1126 = sand.u32 %s120, 1
        %s1127 = scalar_lea.sflag [#allocation4], %s1126
        %s1128 = sand.u32 %s120, 1
        %s1129 = smul.addr %s1128, 16
        %s1130 = scalar_lea.vmem [#allocation5], %s1129
        // Predicated region
        $region37: #{tpu_custom_call.1} parent=31 // pred_check
          %p1131 = pneg %p130
        $region38: #{tpu_custom_call.1} parent=31 // pred_check_branch
          %1133 = sbr.rel (%p1131) target = $region40
        $region39: #{tpu_custom_call.1} parent=31 // pred_region
          %s1135 = ssub.s32 256, 256
          %1136 = vsyncadd %s1127, %s1135
          %s1137 = smul.addr %s25, 2
          %s1138 = smul.addr %s24, 2
          %s1139 = sadd.s32 %s1137, %s1138
          %s1140 = smul.addr %s1139, 128
          %s1141 = scalar_lea.hbm %s3, %s1140
          %s1143 = sshll.u32 %s1130, 4
          %s1144 = int_to_ptr.vmem [resolvable:$true] %s1143
          %1146 = dma.vmem_to_hbm [thread:$0]  %s1144, 256, %s1141, %s1127
        $region40: #{tpu_custom_call.1} parent=31 // pred_fallthru
          _
      $region32: #{tpu_custom_call.1} parent=5 // pred_fallthru
        _
      %p1147 = scmp.le.s32.totalorder 2, %s15
      // Predicated region
      $region41: #{tpu_custom_call.1} parent=5 // pred_check
        %p1148 = pneg %p1147
      $region42: #{tpu_custom_call.1} parent=5 // pred_check_branch
        %1150 = sbr.rel (%p1148) target = $region44
      $region43: #{tpu_custom_call.1} parent=5 // pred_region
        %s1151 = ssub.s32 %s15, 2
        // Predicated region
        $region45: #{tpu_custom_call.1} parent=43 // pred_check
          %p1152 = pneg %p136
        $region46: #{tpu_custom_call.1} parent=43 // pred_check_branch
          %1154 = sbr.rel (%p1152) target = $region48
        $region47: #{tpu_custom_call.1} parent=43 // pred_region
          %s1155 = sand.u32 %s121, 1
          %s1156 = scalar_lea.sflag [#allocation4], %s1155
          %s1157 = sand.u32 %s121, 1
          %s1158 = smul.addr %s1157, 16
          %s1159 = scalar_lea.vmem [#allocation5], %s1158
          %1160 = dma.done %s1156, 256
        $region48: #{tpu_custom_call.1} parent=43 // pred_fallthru
          _
      $region44: #{tpu_custom_call.1} parent=5 // pred_fallthru
        _
    $region6: #{tpu_custom_call.1} parent=1 // loop_footer
      %s19 = sadd.s32 1, %s15
    $region7: #{tpu_custom_call.1} parent=1 // loop_footer_branch
      %14 = sbr.rel target = $region3
    $region8: #{tpu_custom_call.1} parent=1 // loop_exit
      _
    %1161 = vsyncpa [#allocation3], 1
    %s1162 = scalar_lea.sflag [#allocation3], 1
    %1163 = vsyncpa %s1162, 1
    %1164 = vsyncpa [#allocation4], 1
    %s1165 = scalar_lea.sflag [#allocation4], 1
    %1166 = vsyncpa %s1165, 1

</llo_original>
